<compile_context>
chip_gen: v5e
topology: v5e:2x2
jax: 0.10.0
libtpu: 0.0.40
codegen_flags: <defaults>
</compile_context>

<pallas_src>
import math
import jax
import jax.numpy as jnp
from jax import lax
from jax.experimental import pallas as pl
from jax.experimental.pallas import tpu as pltpu

MAX_NUM_ATOMS = 13 + 3   # 16
MAX_ORDER = 14 + 3       # 17


def _round_up(x, m):
    return (x + m - 1) // m * m


def _vmem_limit(nbytes):
    # explicit scoped-VMEM limit: requested bytes + headroom, clamped to [16 MiB, 56 MiB]
    return int(min(max(nbytes + (4 << 20), 16 << 20), 56 << 20))


# ----------------------------- parameter init -----------------------------

def _uniform(key, shape, stdv):
    return jax.random.uniform(key, shape, jnp.float32, minval=-stdv, maxval=stdv)


def init_fgnet_params(key, latent_dim, rank, fact_type, max_order=MAX_ORDER):
    if fact_type == 'B':
        num_params = MAX_NUM_ATOMS ** 2
    elif fact_type == 'C':
        num_params = 1
    elif fact_type == 'A':
        num_params = MAX_NUM_ATOMS
    else:
        raise ValueError("Must specify factor type correctly")
    stdv_top = 1.0 / math.sqrt(rank)        # FGNet.params last dim is rank
    stdv_ho = 1.0 / math.sqrt(latent_dim)   # HighOrderNet.params last dim is out_dim
    keys = jax.random.split(key, 2 + 2 * max_order)
    # TODO(synk): HighOrderNet.fc (nn.Linear) is never used in forward(); omitted.
    return {
        'params': _uniform(keys[0], (num_params, latent_dim, rank), stdv_top),
        'bias': _uniform(keys[1], (num_params, 1, rank), stdv_top),
        'ho_params': jnp.stack([_uniform(keys[2 + 2 * i], (num_params, rank, latent_dim), stdv_ho)
                                for i in range(max_order)]),
        'ho_bias': jnp.stack([_uniform(keys[3 + 2 * i], (num_params, 1, latent_dim), stdv_ho)
                              for i in range(max_order)]),
    }


# ----------------------------- glue: id computation -----------------------------

def _compute_ids(x, fact, fact_type):
    f0 = fact[:, 0]
    if fact_type == 'B':
        pairs = x[f0][:, 1:3]
        ids = pairs[:, 0] * MAX_NUM_ATOMS + pairs[:, 1]
    elif fact_type == 'C':
        ids = jnp.zeros((fact.shape[0],), jnp.int32)
    elif fact_type == 'A':
        ids = x[f0][:, 1]
    else:
        raise ValueError("Must specify factor type correctly")
    return ids.astype(jnp.int32)


# ----------------------------- Pallas kernels -----------------------------

def _stage1_kernel(nodes_ref, w_ref, b_ref, act_ref):
    # act[n, p*R + r] = relu(nodes[n, :] @ params[p, :, r] + bias[p, r])
    # bf16 operands on the MXU, f32 accumulation, bf16 store.
    acc = jnp.dot(nodes_ref[...], w_ref[...], preferred_element_type=jnp.float32)
    act_ref[...] = jnp.maximum(acc + b_ref[...], 0.0).astype(act_ref.dtype)


def _msg_kernel(ids_ref, fp_ref, hobg_ref, how_ref, msg_ref):
    # msg[f, :] = fact_prod[f, :] @ ho_params[i, ids[f]] + ho_bias[i, ids[f]]
    # The id-dependent weight select is folded into the LHS: each factor's fact_prod row is
    # scattered (one-hot) into its id's R-column slot of a (F_TILE, P*R) operand, then a single
    # lane-dense MXU matmul against the UN-gathered (P*R, D) slab does the contraction.
    # Padded rows carry id == -1 and therefore contribute exactly zero.
    # TODO(synk): for fact_type 'B' (P=256) at production F this still does P x the minimal
    # FLOPs; replace with MoE-style grouping (sort factors by id + scalar-prefetched group
    # offsets selecting a single (R, D) slab per step).
    r_pad = fp_ref.shape[2]
    pr = how_ref.shape[1]
    num_p = pr // r_pad
    ids = ids_ref[...]                                                  # (F_TILE, 1) int32
    fp = fp_ref[0]                                                      # (F_TILE, R_pad) bf16
    slab = lax.broadcasted_iota(jnp.int32, (1, pr), 1) // r_pad         # (1, PR): slab id / column
    combined = jnp.where(ids == slab, jnp.tile(fp, (1, num_p)), 0)      # (F_TILE, PR) bf16
    msg = jnp.dot(combined, how_ref[0], preferred_element_type=jnp.float32) + hobg_ref[0]
    msg_ref[0] = msg.astype(msg_ref.dtype)


def _scatter_kernel(msg_ref, fcol_ref, out_ref):
    # out[n, :] += sum_f [fact[f, i] == n] * msg[i, f, :], accumulated over the order axis.
    ni = pl.program_id(0)
    i = pl.program_id(1)
    tn = out_ref.shape[0]

    @pl.when(i == 0)
    def _():
        out_ref[...] = jnp.zeros_like(out_ref)

    # node<-edge one-hot from a narrow (TN,1) iota vs the (1, F_pad) fact column (-1 on padding).
    row_ids = ni * tn + lax.broadcasted_iota(jnp.int32, (tn, 1), 0)     # (TN, 1)
    nte = (row_ids == fcol_ref[0]).astype(jnp.bfloat16)                 # (TN, F_pad) lane-dense
    out_ref[...] += jnp.dot(nte, msg_ref[0], preferred_element_type=jnp.float32)


# ----------------------------- forward wrapper -----------------------------

def fgnet_forward(params, x, nodes, fact, fact_type):
    N, D = nodes.shape
    F_, order = fact.shape
    P, _, R = params['params'].shape

    D_pad = _round_up(D, 128)                          # lane-dense latent dim
    R_pad = _round_up(R, 128)                          # lane-dense rank
    PR = P * R_pad
    PR_TILE = PR if PR <= 4096 else math.gcd(PR, 4096) # stage-1 output tile along P*R
    pr_tiles = PR // PR_TILE
    TN = min(_round_up(N, 8), 256)                     # N tile (parallel grid axis)
    N_pad = _round_up(N, TN)
    n_tiles = N_pad // TN
    F_TILE = min(512 if P <= 32 else 128, _round_up(F_, 128))
    F_pad = _round_up(F_, F_TILE)                      # F padded to a multiple of 128
    f_tiles = F_pad // F_TILE

    ids = _compute_ids(x, fact, fact_type)                                   # (F,)
    ids_pad = jnp.full((F_pad,), -1, jnp.int32).at[:F_].set(ids)
    ids_clip = jnp.clip(ids_pad, 0, P - 1)
    fact_t = fact.T.astype(jnp.int32)                                        # (order, F)
    fact_gather = jnp.zeros((order, F_pad), jnp.int32).at[:, :F_].set(fact_t)
    fcol = jnp.full((order, 1, F_pad), -1, jnp.int32).at[:, 0, :F_].set(fact_t)

    # ---------------- stage 1: all-P transform matmul (bf16 operands) ----------------
    w = jnp.zeros((P, D_pad, R_pad), jnp.float32).at[:, :D, :R].set(params['params'])
    w = jnp.transpose(w, (1, 0, 2)).reshape(D_pad, PR).astype(jnp.bfloat16)  # (D_pad, P*R_pad)
    b = jnp.zeros((P, R_pad), jnp.float32).at[:, :R].set(params['bias'][:, 0, :]).reshape(1, PR)
    nodes_p = jnp.zeros((N_pad, D_pad), jnp.float32).at[:N, :D].set(nodes).astype(jnp.bfloat16)

    s1_blocks = TN * D_pad * 2 + D_pad * PR_TILE * 2 + PR_TILE * 4 + TN * PR_TILE * 2
    act = pl.pallas_call(
        _stage1_kernel,
        out_shape=jax.ShapeDtypeStruct((N_pad, PR), jnp.bfloat16),
        grid_spec=pltpu.PrefetchScalarGridSpec(
            num_scalar_prefetch=0,
            grid=(n_tiles, pr_tiles),
            in_specs=[
                pl.BlockSpec((TN, D_pad), lambda ni, pj: (ni, 0)),
                pl.BlockSpec((D_pad, PR_TILE), lambda ni, pj: (0, pj)),
                pl.BlockSpec((1, PR_TILE), lambda ni, pj: (0, pj)),
            ],
            out_specs=pl.BlockSpec((TN, PR_TILE), lambda ni, pj: (ni, pj)),
        ),
        compiler_params=pltpu.CompilerParams(
            dimension_semantics=("parallel", "parallel"),
            vmem_limit_bytes=_vmem_limit(2 * s1_blocks + TN * PR_TILE * 4),
        ),
    )(nodes_p, w, b)

    # -------- XLA glue: activation/index gathers + leave-one-out products (f32, exact) --------
    act_r = act.reshape(N_pad, P, R_pad)
    transform = act_r[fact_gather, ids_clip[None, :], :].astype(jnp.float32)  # (order,F_pad,R_pad)
    ones = jnp.ones_like(transform[:1])
    pre = jnp.concatenate([ones, jnp.cumprod(transform, axis=0)[:-1]], axis=0)
    suf = jnp.concatenate([jnp.cumprod(transform[::-1], axis=0)[::-1][1:], ones], axis=0)
    fact_prod = (pre * suf).astype(jnp.bfloat16)                              # (order,F_pad,R_pad)

    # ---------------- stage 2a: id-selected back-projection (bf16 operands) ----------------
    how = jnp.zeros((order, P, R_pad, D_pad), jnp.float32).at[:, :, :R, :D].set(
        params['ho_params'][:order]).reshape(order, PR, D_pad).astype(jnp.bfloat16)
    hob_full = jnp.zeros((order, P, D_pad), jnp.float32).at[:, :, :D].set(
        params['ho_bias'][:order, :, 0, :])
    hob_g = hob_full[jnp.arange(order)[:, None], ids_clip[None, :], :]        # bias out of P-loop
    hob_g = jnp.where((ids_pad >= 0)[None, :, None], hob_g, 0.0)              # (order,F_pad,D_pad)
    ids_col = ids_pad.reshape(F_pad, 1)

    m_blocks = (F_TILE * 4 + F_TILE * R_pad * 2 + F_TILE * D_pad * 4
                + PR * D_pad * 2 + F_TILE * D_pad * 2)
    m_temps = F_TILE * PR * 8 + F_TILE * D_pad * 4
    msg = pl.pallas_call(
        _msg_kernel,
        out_shape=jax.ShapeDtypeStruct((order, F_pad, D_pad), jnp.bfloat16),
        grid_spec=pltpu.PrefetchScalarGridSpec(
            num_scalar_prefetch=0,
            grid=(order, f_tiles),
            in_specs=[
                pl.BlockSpec((F_TILE, 1), lambda i, fb: (fb, 0)),
                pl.BlockSpec((1, F_TILE, R_pad), lambda i, fb: (i, fb, 0)),
                pl.BlockSpec((1, F_TILE, D_pad), lambda i, fb: (i, fb, 0)),
                pl.BlockSpec((1, PR, D_pad), lambda i, fb: (i, 0, 0)),
            ],
            out_specs=pl.BlockSpec((1, F_TILE, D_pad), lambda i, fb: (i, fb, 0)),
        ),
        compiler_params=pltpu.CompilerParams(
            dimension_semantics=("parallel", "parallel"),
            vmem_limit_bytes=_vmem_limit(2 * m_blocks + m_temps),
        ),
    )(ids_col, fact_prod, hob_g, how)

    # ---------------- stage 2b: node <- edge scatter, accumulated over order ----------------
    # TODO(synk): for very large F add an F-tile axis here as well (consecutive, 'arbitrary').
    s_blocks = F_pad * D_pad * 2 + F_pad * 4 + TN * D_pad * 4
    s_temps = TN * F_pad * 4
    node_msg = pl.pallas_call(
        _scatter_kernel,
        out_shape=jax.ShapeDtypeStruct((N_pad, D_pad), jnp.float32),
        grid_spec=pltpu.PrefetchScalarGridSpec(
            num_scalar_prefetch=0,
            grid=(n_tiles, order),
            in_specs=[
                pl.BlockSpec((1, F_pad, D_pad), lambda ni, i: (i, 0, 0)),
                pl.BlockSpec((1, 1, F_pad), lambda ni, i: (i, 0, 0)),
            ],
            out_specs=pl.BlockSpec((TN, D_pad), lambda ni, i: (ni, 0)),
        ),
        compiler_params=pltpu.CompilerParams(
            dimension_semantics=("parallel", "arbitrary"),   # order axis accumulates sequentially
            vmem_limit_bytes=_vmem_limit(2 * s_blocks + s_temps),
        ),
    )(msg, fcol)

    return node_msg[:N, :D]


# ----------------------------- pure-JAX reference -----------------------------

def fgnet_reference(params, x, nodes, fact, fact_type):
    """Mirrors the PyTorch forward exactly (gathered weights, explicit one-hots, f32)."""
    HI = jax.lax.Precision.HIGHEST
    N, D = nodes.shape
    F_, order = fact.shape
    ids = _compute_ids(x, fact, fact_type)
    pg = params['params'][ids]                                  # (F, D, R)
    bg = params['bias'][ids][:, 0, :]                           # (F, R)
    transform = jnp.stack([
        jnp.maximum(jnp.einsum('fd,fdr->fr', nodes[fact[:, i]], pg, precision=HI) + bg, 0.0)
        for i in range(order)])                                 # (order, F, R)
    node_msg = jnp.zeros((N, D), jnp.float32)
    for i in range(order):
        keep = jnp.array([j for j in range(order) if j != i], jnp.int32)
        fact_prod = jnp.prod(transform[keep], axis=0)           # (F, R)
        msg = jnp.einsum('fr,frd->fd', fact_prod, params['ho_params'][i][ids],
                         precision=HI) + params['ho_bias'][i][ids][:, 0, :]
        nte = (fact[:, i][None, :] == jnp.arange(N)[:, None]).astype(jnp.float32)  # (N, F)
        node_msg = node_msg + jnp.matmul(nte, msg, precision=HI)
    return node_msg


# ----------------------------- main -----------------------------

if __name__ == "__main__":
    key = jax.random.PRNGKey(0)
    kp, kn, kf, kx = jax.random.split(key, 4)

    # small shapes consistent with the module defaults (latent_dim=13), reduced rank
    N, D, R = 10, 13, 32        # num nodes, latent_dim (in_dim), rank
    F_, order = 6, 3            # num factors, fact.size(1)
    fact_type = 'A'

    params = init_fgnet_params(kp, latent_dim=D, rank=R, fact_type=fact_type)
    nodes = jax.random.normal(kn, (N, D), dtype=jnp.float32)
    fact = jax.random.randint(kf, (F_, order), 0, N, dtype=jnp.int32)
    # x: attribute table; columns 1 (and 2) hold atom-type ids in [0, MAX_NUM_ATOMS)
    x = jax.random.randint(kx, (N, 3), 0, MAX_NUM_ATOMS, dtype=jnp.int32)

    out = fgnet_forward(params, x, nodes, fact, fact_type)
    out = jax.block_until_ready(out)

    ref = fgnet_reference(params, x, nodes, fact, fact_type)
    assert out.shape == (N, D)
    # bf16 MXU operands (weights/activations) vs the all-f32 reference: expect ~1e-3..1e-2 abs err.
    err = float(jnp.max(jnp.abs(out - ref)))
    assert jnp.allclose(out, ref, atol=3e-2, rtol=3e-2), (
        f"Pallas output mismatch vs reference: max abs err {err}")
    print("KERNEL_OK")
</pallas_src>

<mosaic_0001>
module attributes {stable_mosaic.version = 11 : i64} {
  func.func @_stage1_kernel(%arg0: i32, %arg1: i32, %arg2: memref<16x128xbf16, #tpu.memory_space<vmem>>, %arg3: memref<128x2048xbf16, #tpu.memory_space<vmem>>, %arg4: memref<1x2048xf32, #tpu.memory_space<vmem>>, %arg5: memref<16x2048xbf16, #tpu.memory_space<vmem>>) attributes {dimension_semantics = [#tpu.dimension_semantics<parallel>, #tpu.dimension_semantics<parallel>], iteration_bounds = array<i64: 1, 1>, scalar_prefetch = 0 : i64, scratch_operands = 0 : i64, tpu.core_type = #tpu.core_type<tc>, window_params = [{transform_indices = @transform_0, window_bounds = array<i64: 16, 128>}, {transform_indices = @transform_1, window_bounds = array<i64: 128, 2048>}, {transform_indices = @transform_2, window_bounds = array<i64: 1, 2048>}, {transform_indices = @transform_3, window_bounds = array<i64: 16, 2048>}]} {
    %c0 = arith.constant 0 : index
    %c0_0 = arith.constant 0 : index
    %0 = vector.load %arg2[%c0, %c0_0] : memref<16x128xbf16, #tpu.memory_space<vmem>>, vector<16x128xbf16>
    %c0_1 = arith.constant 0 : index
    %c0_2 = arith.constant 0 : index
    %1 = vector.load %arg3[%c0_1, %c0_2] : memref<128x2048xbf16, #tpu.memory_space<vmem>>, vector<128x2048xbf16>
    %cst = arith.constant dense<0.000000e+00> : vector<16x2048xf32>
    %2 = tpu.matmul %0, %1, %cst {dimension_numbers = #tpu.dot_dimension_numbers<[1], [0], [0], [1], [0, 0, 1, 1], [], []>} : vector<16x128xbf16>, vector<128x2048xbf16>, vector<16x2048xf32> -> vector<16x2048xf32>
    %c0_3 = arith.constant 0 : index
    %c0_4 = arith.constant 0 : index
    %3 = vector.load %arg4[%c0_3, %c0_4] : memref<1x2048xf32, #tpu.memory_space<vmem>>, vector<1x2048xf32>
    %4 = vector.broadcast %3 : vector<1x2048xf32> to vector<16x2048xf32>
    %5 = arith.addf %2, %4 : vector<16x2048xf32>
    %cst_5 = arith.constant 0.000000e+00 : f32
    %6 = vector.broadcast %cst_5 : f32 to vector<16x2048xf32>
    %7 = arith.maximumf %5, %6 : vector<16x2048xf32>
    %8 = arith.truncf %7 : vector<16x2048xf32> to vector<16x2048xbf16>
    %c0_6 = arith.constant 0 : index
    %c0_7 = arith.constant 0 : index
    %9 = vector.load %arg5[%c0_6, %c0_7] : memref<16x2048xbf16, #tpu.memory_space<vmem>>, vector<16x2048xbf16>
    tpu.vector_store %arg5[%c0_6, %c0_7], %8 {strides = array<i32>} : memref<16x2048xbf16, #tpu.memory_space<vmem>>, vector<16x2048xbf16>,
    return
  }
  func.func @transform_0(%arg0: i32, %arg1: i32) -> (i32, i32) {
    %c0_i32 = arith.constant 0 : i32
    %c0_i32_0 = arith.constant 0 : i32
    return %arg0, %c0_i32 : i32, i32
  }
  func.func @transform_1(%arg0: i32, %arg1: i32) -> (i32, i32) {
    %c0_i32 = arith.constant 0 : i32
    %c0_i32_0 = arith.constant 0 : i32
    return %c0_i32, %arg1 : i32, i32
  }
  func.func @transform_2(%arg0: i32, %arg1: i32) -> (i32, i32) {
    %c0_i32 = arith.constant 0 : i32
    %c0_i32_0 = arith.constant 0 : i32
    return %c0_i32, %arg1 : i32, i32
  }
  func.func @transform_3(%arg0: i32, %arg1: i32) -> (i32, i32) {
    %c0_i32 = arith.constant 0 : i32
    return %arg0, %arg1 : i32, i32
  }
}

</mosaic_0001>

<llo_original>
// kernel: tpu_custom_call.1
$region0: #{tpu_custom_call.1}
  #allocation0 [shape = 'u32[]', space=smem, size = 0x4, offset = 0x4, fixed_abs, tag = 'smem constant byte address 0x4 - core index']
  #allocation1 [shape = 'u32[72,128]{1,0:T(1,128)}', space=vmem, size = 0x9000, scoped, tag = 'internal scratch']
  %s0 = inlined_call_operand.hbm [shape: bf16[16,128], index: 0, kind: input, shape index: {}]
  %s1 = inlined_call_operand.hbm [shape: bf16[128,2048], index: 1, kind: input, shape index: {}]
  %s2 = inlined_call_operand.hbm [shape: f32[1,2048], index: 2, kind: input, shape index: {}]
  %s3 = inlined_call_operand.hbm [shape: bf16[16,2048], index: 3, kind: output, shape index: {}]
  %s4 = sld [smem:[#allocation0]]
  $region34: #{tpu_custom_call.1} parent=0
    _
  %s6 = ssub.s32 1, %s4
  %s7 = scalar_select 0, %s6, %s4
  $region1: #{tpu_custom_call.1} parent=0
    #allocation2 [shape = 'u8[4096]{0}', space=vmem, size = 0x1000, scoped, tag = 'input window, operand 0, single buffered']
    #allocation3 [shape = 's32[1]{0}', space=sflag, size = 0x4, scoped, tag = 'scoped memory for tpu_custom_call.1']
    #allocation4 [shape = 's32[1]{0}', space=sflag, size = 0x4, scoped, tag = 'scoped memory for tpu_custom_call.1']
    #allocation5 [shape = 'u8[524288]{0}', space=vmem, size = 0x80000, scoped, tag = 'input window, operand 1, single buffered']
    #allocation6 [shape = 's32[1]{0}', space=sflag, size = 0x4, scoped, tag = 'scoped memory for tpu_custom_call.1']
    #allocation7 [shape = 'u8[8192]{0}', space=vmem, size = 0x2000, scoped, tag = 'input window, operand 2, single buffered']
    #allocation8 [shape = 'u8[65536]{0}', space=vmem, size = 0x10000, scoped, tag = 'output window, operand 0, single buffered']
    %8 = vsyncpa [#allocation3], 0
    %9 = vsyncpa [#allocation6], 0
    %10 = vsyncpa [#allocation4], 0
    // Predicated region
    $region2: #{tpu_custom_call.1} parent=1 // pred_check
      _
    $region3: #{tpu_custom_call.1} parent=1 // pred_check_branch
      %12 = sbr.rel (0) target = $region5
    $region4: #{tpu_custom_call.1} parent=1 // pred_region
      %14 = vsyncadd [#allocation3], 0
      %s15 = sshll.u32 %s0, 4
      %s16 = int_to_ptr.hbm [resolvable:$true] %s15
      %s17 = sshll.u32 [#allocation2], 4
      %s18 = int_to_ptr.vmem [resolvable:$true] %s17
      %23 = dma.hbm_to_vmem [thread:$0]  %s16, 128, %s18, [#allocation3], 64, 64, 4
    $region5: #{tpu_custom_call.1} parent=1 // pred_fallthru
      _
    // Predicated region
    $region6: #{tpu_custom_call.1} parent=1 // pred_check
      _
    $region7: #{tpu_custom_call.1} parent=1 // pred_check_branch
      %25 = sbr.rel (0) target = $region9
    $region8: #{tpu_custom_call.1} parent=1 // pred_region
      %27 = vsyncadd [#allocation6], 0
      %s28 = sshll.u32 %s1, 4
      %s29 = int_to_ptr.hbm [resolvable:$true] %s28
      %s30 = sshll.u32 [#allocation5], 4
      %s31 = int_to_ptr.vmem [resolvable:$true] %s30
      %36 = dma.hbm_to_vmem [thread:$0]  %s29, 16384, %s31, [#allocation6], 1024, 1024, 64
    $region9: #{tpu_custom_call.1} parent=1 // pred_fallthru
      _
    // Predicated region
    $region10: #{tpu_custom_call.1} parent=1 // pred_check
      _
    $region11: #{tpu_custom_call.1} parent=1 // pred_check_branch
      %38 = sbr.rel (0) target = $region13
    $region12: #{tpu_custom_call.1} parent=1 // pred_region
      %40 = vsyncadd [#allocation6], 0
      %s42 = sshll.u32 %s2, 4
      %s43 = int_to_ptr.hbm [resolvable:$true] %s42
      %s44 = sshll.u32 [#allocation7], 4
      %s45 = int_to_ptr.vmem [resolvable:$true] %s44
      %47 = dma.hbm_to_vmem [thread:$0]  %s43, 256, %s45, [#allocation6]
    $region13: #{tpu_custom_call.1} parent=1 // pred_fallthru
      _
    // Predicated region
    $region14: #{tpu_custom_call.1} parent=1 // pred_check
      _
    $region15: #{tpu_custom_call.1} parent=1 // pred_check_branch
      %49 = sbr.rel (0) target = $region17
    $region16: #{tpu_custom_call.1} parent=1 // pred_region
      %51 = dma.done [#allocation3], 128
    $region17: #{tpu_custom_call.1} parent=1 // pred_fallthru
      _
    // Predicated region
    $region18: #{tpu_custom_call.1} parent=1 // pred_check
      _
    $region19: #{tpu_custom_call.1} parent=1 // pred_check_branch
      %53 = sbr.rel (0) target = $region21
    $region20: #{tpu_custom_call.1} parent=1 // pred_region
      %55 = dma.done [#allocation6], 16384
    $region21: #{tpu_custom_call.1} parent=1 // pred_fallthru
      _
    // Predicated region
    $region22: #{tpu_custom_call.1} parent=1 // pred_check
      _
    $region23: #{tpu_custom_call.1} parent=1 // pred_check_branch
      %57 = sbr.rel (0) target = $region25
    $region24: #{tpu_custom_call.1} parent=1 // pred_region
      %59 = dma.done [#allocation6], 256
    $region25: #{tpu_custom_call.1} parent=1 // pred_fallthru
      _
    %v60 = vld [vmem:[#allocation2] sm:$0xf]
    %v61 = vld [vmem:[#allocation2 + $0x4] sm:$0xf]
    %v62 = vld [vmem:[#allocation5] sm:$0xff]
    %v63 = vld [vmem:[#allocation5 + $0x8] sm:$0xff]
    %v64 = vld [vmem:[#allocation5 + $0x10] sm:$0xff]
    %v65 = vld [vmem:[#allocation5 + $0x18] sm:$0xff]
    %v66 = vld [vmem:[#allocation5 + $0x20] sm:$0xff]
    %v67 = vld [vmem:[#allocation5 + $0x28] sm:$0xff]
    %v68 = vld [vmem:[#allocation5 + $0x30] sm:$0xff]
    %v69 = vld [vmem:[#allocation5 + $0x38] sm:$0xff]
    %v70 = vld [vmem:[#allocation5 + $0x40] sm:$0xff]
    %v71 = vld [vmem:[#allocation5 + $0x48] sm:$0xff]
    %v72 = vld [vmem:[#allocation5 + $0x50] sm:$0xff]
    %v73 = vld [vmem:[#allocation5 + $0x58] sm:$0xff]
    %v74 = vld [vmem:[#allocation5 + $0x60] sm:$0xff]
    %v75 = vld [vmem:[#allocation5 + $0x68] sm:$0xff]
    %v76 = vld [vmem:[#allocation5 + $0x70] sm:$0xff]
    %v77 = vld [vmem:[#allocation5 + $0x78] sm:$0xff]
    %v78 = vld [vmem:[#allocation5 + $0x80] sm:$0xff]
    %v79 = vld [vmem:[#allocation5 + $0x88] sm:$0xff]
    %v80 = vld [vmem:[#allocation5 + $0x90] sm:$0xff]
    %v81 = vld [vmem:[#allocation5 + $0x98] sm:$0xff]
    %v82 = vld [vmem:[#allocation5 + $0xa0] sm:$0xff]
    %v83 = vld [vmem:[#allocation5 + $0xa8] sm:$0xff]
    %v84 = vld [vmem:[#allocation5 + $0xb0] sm:$0xff]
    %v85 = vld [vmem:[#allocation5 + $0xb8] sm:$0xff]
    %v86 = vld [vmem:[#allocation5 + $0xc0] sm:$0xff]
    %v87 = vld [vmem:[#allocation5 + $0xc8] sm:$0xff]
    %v88 = vld [vmem:[#allocation5 + $0xd0] sm:$0xff]
    %v89 = vld [vmem:[#allocation5 + $0xd8] sm:$0xff]
    %v90 = vld [vmem:[#allocation5 + $0xe0] sm:$0xff]
    %v91 = vld [vmem:[#allocation5 + $0xe8] sm:$0xff]
    %v92 = vld [vmem:[#allocation5 + $0xf0] sm:$0xff]
    %v93 = vld [vmem:[#allocation5 + $0xf8] sm:$0xff]
    %v94 = vld [vmem:[#allocation5 + $0x100] sm:$0xff]
    %v95 = vld [vmem:[#allocation5 + $0x108] sm:$0xff]
    %v96 = vld [vmem:[#allocation5 + $0x110] sm:$0xff]
    %v97 = vld [vmem:[#allocation5 + $0x118] sm:$0xff]
    %v98 = vld [vmem:[#allocation5 + $0x120] sm:$0xff]
    %v99 = vld [vmem:[#allocation5 + $0x128] sm:$0xff]
    %v100 = vld [vmem:[#allocation5 + $0x130] sm:$0xff]
    %v101 = vld [vmem:[#allocation5 + $0x138] sm:$0xff]
    %v102 = vld [vmem:[#allocation5 + $0x140] sm:$0xff]
    %v103 = vld [vmem:[#allocation5 + $0x148] sm:$0xff]
    %v104 = vld [vmem:[#allocation5 + $0x150] sm:$0xff]
    %v105 = vld [vmem:[#allocation5 + $0x158] sm:$0xff]
    %v106 = vld [vmem:[#allocation5 + $0x160] sm:$0xff]
    %v107 = vld [vmem:[#allocation5 + $0x168] sm:$0xff]
    %v108 = vld [vmem:[#allocation5 + $0x170] sm:$0xff]
    %v109 = vld [vmem:[#allocation5 + $0x178] sm:$0xff]
    %v110 = vld [vmem:[#allocation5 + $0x180] sm:$0xff]
    %v111 = vld [vmem:[#allocation5 + $0x188] sm:$0xff]
    %v112 = vld [vmem:[#allocation5 + $0x190] sm:$0xff]
    %v113 = vld [vmem:[#allocation5 + $0x198] sm:$0xff]
    %v114 = vld [vmem:[#allocation5 + $0x1a0] sm:$0xff]
    %v115 = vld [vmem:[#allocation5 + $0x1a8] sm:$0xff]
    %v116 = vld [vmem:[#allocation5 + $0x1b0] sm:$0xff]
    %v117 = vld [vmem:[#allocation5 + $0x1b8] sm:$0xff]
    %v118 = vld [vmem:[#allocation5 + $0x1c0] sm:$0xff]
    %v119 = vld [vmem:[#allocation5 + $0x1c8] sm:$0xff]
    %v120 = vld [vmem:[#allocation5 + $0x1d0] sm:$0xff]
    %v121 = vld [vmem:[#allocation5 + $0x1d8] sm:$0xff]
    %v122 = vld [vmem:[#allocation5 + $0x1e0] sm:$0xff]
    %v123 = vld [vmem:[#allocation5 + $0x1e8] sm:$0xff]
    %v124 = vld [vmem:[#allocation5 + $0x1f0] sm:$0xff]
    %v125 = vld [vmem:[#allocation5 + $0x1f8] sm:$0xff]
    %v126 = vld [vmem:[#allocation5 + $0x200] sm:$0xff]
    %v127 = vld [vmem:[#allocation5 + $0x208] sm:$0xff]
    %v128 = vld [vmem:[#allocation5 + $0x210] sm:$0xff]
    %v129 = vld [vmem:[#allocation5 + $0x218] sm:$0xff]
    %v130 = vld [vmem:[#allocation5 + $0x220] sm:$0xff]
    %v131 = vld [vmem:[#allocation5 + $0x228] sm:$0xff]
    %v132 = vld [vmem:[#allocation5 + $0x230] sm:$0xff]
    %v133 = vld [vmem:[#allocation5 + $0x238] sm:$0xff]
    %v134 = vld [vmem:[#allocation5 + $0x240] sm:$0xff]
    %v135 = vld [vmem:[#allocation5 + $0x248] sm:$0xff]
    %v136 = vld [vmem:[#allocation5 + $0x250] sm:$0xff]
    %v137 = vld [vmem:[#allocation5 + $0x258] sm:$0xff]
    %v138 = vld [vmem:[#allocation5 + $0x260] sm:$0xff]
    %v139 = vld [vmem:[#allocation5 + $0x268] sm:$0xff]
    %v140 = vld [vmem:[#allocation5 + $0x270] sm:$0xff]
    %v141 = vld [vmem:[#allocation5 + $0x278] sm:$0xff]
    %v142 = vld [vmem:[#allocation5 + $0x280] sm:$0xff]
    %v143 = vld [vmem:[#allocation5 + $0x288] sm:$0xff]
    %v144 = vld [vmem:[#allocation5 + $0x290] sm:$0xff]
    %v145 = vld [vmem:[#allocation5 + $0x298] sm:$0xff]
    %v146 = vld [vmem:[#allocation5 + $0x2a0] sm:$0xff]
    %v147 = vld [vmem:[#allocation5 + $0x2a8] sm:$0xff]
    %v148 = vld [vmem:[#allocation5 + $0x2b0] sm:$0xff]
    %v149 = vld [vmem:[#allocation5 + $0x2b8] sm:$0xff]
    %v150 = vld [vmem:[#allocation5 + $0x2c0] sm:$0xff]
    %v151 = vld [vmem:[#allocation5 + $0x2c8] sm:$0xff]
    %v152 = vld [vmem:[#allocation5 + $0x2d0] sm:$0xff]
    %v153 = vld [vmem:[#allocation5 + $0x2d8] sm:$0xff]
    %v154 = vld [vmem:[#allocation5 + $0x2e0] sm:$0xff]
    %v155 = vld [vmem:[#allocation5 + $0x2e8] sm:$0xff]
    %v156 = vld [vmem:[#allocation5 + $0x2f0] sm:$0xff]
    %v157 = vld [vmem:[#allocation5 + $0x2f8] sm:$0xff]
    %v158 = vld [vmem:[#allocation5 + $0x300] sm:$0xff]
    %v159 = vld [vmem:[#allocation5 + $0x308] sm:$0xff]
    %v160 = vld [vmem:[#allocation5 + $0x310] sm:$0xff]
    %v161 = vld [vmem:[#allocation5 + $0x318] sm:$0xff]
    %v162 = vld [vmem:[#allocation5 + $0x320] sm:$0xff]
    %v163 = vld [vmem:[#allocation5 + $0x328] sm:$0xff]
    %v164 = vld [vmem:[#allocation5 + $0x330] sm:$0xff]
    %v165 = vld [vmem:[#allocation5 + $0x338] sm:$0xff]
    %v166 = vld [vmem:[#allocation5 + $0x340] sm:$0xff]
    %v167 = vld [vmem:[#allocation5 + $0x348] sm:$0xff]
    %v168 = vld [vmem:[#allocation5 + $0x350] sm:$0xff]
    %v169 = vld [vmem:[#allocation5 + $0x358] sm:$0xff]
    %v170 = vld [vmem:[#allocation5 + $0x360] sm:$0xff]
    %v171 = vld [vmem:[#allocation5 + $0x368] sm:$0xff]
    %v172 = vld [vmem:[#allocation5 + $0x370] sm:$0xff]
    %v173 = vld [vmem:[#allocation5 + $0x378] sm:$0xff]
    %v174 = vld [vmem:[#allocation5 + $0x380] sm:$0xff]
    %v175 = vld [vmem:[#allocation5 + $0x388] sm:$0xff]
    %v176 = vld [vmem:[#allocation5 + $0x390] sm:$0xff]
    %v177 = vld [vmem:[#allocation5 + $0x398] sm:$0xff]
    %v178 = vld [vmem:[#allocation5 + $0x3a0] sm:$0xff]
    %v179 = vld [vmem:[#allocation5 + $0x3a8] sm:$0xff]
    %v180 = vld [vmem:[#allocation5 + $0x3b0] sm:$0xff]
    %v181 = vld [vmem:[#allocation5 + $0x3b8] sm:$0xff]
    %v182 = vld [vmem:[#allocation5 + $0x3c0] sm:$0xff]
    %v183 = vld [vmem:[#allocation5 + $0x3c8] sm:$0xff]
    %v184 = vld [vmem:[#allocation5 + $0x3d0] sm:$0xff]
    %v185 = vld [vmem:[#allocation5 + $0x3d8] sm:$0xff]
    %v186 = vld [vmem:[#allocation5 + $0x3e0] sm:$0xff]
    %v187 = vld [vmem:[#allocation5 + $0x3e8] sm:$0xff]
    %v188 = vld [vmem:[#allocation5 + $0x3f0] sm:$0xff]
    %v189 = vld [vmem:[#allocation5 + $0x3f8] sm:$0xff]
    %v190 = vld [vmem:[#allocation7] sm:$0xff]
    %v191 = vld [vmem:[#allocation7 + $0x8] sm:$0xff]
    %v194 = vperm.slane %v190, 0
    %v195 = vperm.slane %v190, 1
    %v196 = vperm.slane %v190, 2
    %v197 = vperm.slane %v190, 3
    %v198 = vperm.slane %v190, 4
    %v199 = vperm.slane %v190, 5
    %v200 = vperm.slane %v190, 6
    %v201 = vperm.slane %v190, 7
    %v202 = vperm.slane %v191, 0
    %v203 = vperm.slane %v191, 1
    %v204 = vperm.slane %v191, 2
    %v205 = vperm.slane %v191, 3
    %v206 = vperm.slane %v191, 4
    %v207 = vperm.slane %v191, 5
    %v208 = vperm.slane %v191, 6
    %v209 = vperm.slane %v191, 7
    %v228 = vunpack.c.l.b16 %v60
    %v229 = vunpack.c.l.b16 %v61
    %v230 = vpack.c.b16 %v229, %v228
    %v360 = vunpack.c.l.b16 %v62
    %v361 = vunpack.c.h.b16 %v62
    %v362 = vunpack.c.l.b16 %v63
    %v363 = vunpack.c.h.b16 %v63
    %v364 = vunpack.c.l.b16 %v64
    %v365 = vunpack.c.h.b16 %v64
    %v366 = vunpack.c.l.b16 %v65
    %v367 = vunpack.c.h.b16 %v65
    %v368 = vunpack.c.l.b16 %v66
    %v369 = vunpack.c.h.b16 %v66
    %v370 = vunpack.c.l.b16 %v67
    %v371 = vunpack.c.h.b16 %v67
    %v372 = vunpack.c.l.b16 %v68
    %v373 = vunpack.c.h.b16 %v68
    %v374 = vunpack.c.l.b16 %v69
    %v375 = vunpack.c.h.b16 %v69
    %v376 = vunpack.c.l.b16 %v70
    %v377 = vunpack.c.h.b16 %v70
    %v378 = vunpack.c.l.b16 %v71
    %v379 = vunpack.c.h.b16 %v71
    %v380 = vunpack.c.l.b16 %v72
    %v381 = vunpack.c.h.b16 %v72
    %v382 = vunpack.c.l.b16 %v73
    %v383 = vunpack.c.h.b16 %v73
    %v384 = vunpack.c.l.b16 %v74
    %v385 = vunpack.c.h.b16 %v74
    %v386 = vunpack.c.l.b16 %v75
    %v387 = vunpack.c.h.b16 %v75
    %v388 = vunpack.c.l.b16 %v76
    %v389 = vunpack.c.h.b16 %v76
    %v390 = vunpack.c.l.b16 %v77
    %v391 = vunpack.c.h.b16 %v77
    %v392 = vunpack.c.l.b16 %v78
    %v393 = vunpack.c.h.b16 %v78
    %v394 = vunpack.c.l.b16 %v79
    %v395 = vunpack.c.h.b16 %v79
    %v396 = vunpack.c.l.b16 %v80
    %v397 = vunpack.c.h.b16 %v80
    %v398 = vunpack.c.l.b16 %v81
    %v399 = vunpack.c.h.b16 %v81
    %v400 = vunpack.c.l.b16 %v82
    %v401 = vunpack.c.h.b16 %v82
    %v402 = vunpack.c.l.b16 %v83
    %v403 = vunpack.c.h.b16 %v83
    %v404 = vunpack.c.l.b16 %v84
    %v405 = vunpack.c.h.b16 %v84
    %v406 = vunpack.c.l.b16 %v85
    %v407 = vunpack.c.h.b16 %v85
    %v408 = vunpack.c.l.b16 %v86
    %v409 = vunpack.c.h.b16 %v86
    %v410 = vunpack.c.l.b16 %v87
    %v411 = vunpack.c.h.b16 %v87
    %v412 = vunpack.c.l.b16 %v88
    %v413 = vunpack.c.h.b16 %v88
    %v414 = vunpack.c.l.b16 %v89
    %v415 = vunpack.c.h.b16 %v89
    %v416 = vunpack.c.l.b16 %v90
    %v417 = vunpack.c.h.b16 %v90
    %v418 = vunpack.c.l.b16 %v91
    %v419 = vunpack.c.h.b16 %v91
    %v420 = vunpack.c.l.b16 %v92
    %v421 = vunpack.c.h.b16 %v92
    %v422 = vunpack.c.l.b16 %v93
    %v423 = vunpack.c.h.b16 %v93
    %v424 = vunpack.c.l.b16 %v94
    %v425 = vunpack.c.h.b16 %v94
    %v426 = vunpack.c.l.b16 %v95
    %v427 = vunpack.c.h.b16 %v95
    %v428 = vunpack.c.l.b16 %v96
    %v429 = vunpack.c.h.b16 %v96
    %v430 = vunpack.c.l.b16 %v97
    %v431 = vunpack.c.h.b16 %v97
    %v432 = vunpack.c.l.b16 %v98
    %v433 = vunpack.c.h.b16 %v98
    %v434 = vunpack.c.l.b16 %v99
    %v435 = vunpack.c.h.b16 %v99
    %v436 = vunpack.c.l.b16 %v100
    %v437 = vunpack.c.h.b16 %v100
    %v438 = vunpack.c.l.b16 %v101
    %v439 = vunpack.c.h.b16 %v101
    %v440 = vunpack.c.l.b16 %v102
    %v441 = vunpack.c.h.b16 %v102
    %v442 = vunpack.c.l.b16 %v103
    %v443 = vunpack.c.h.b16 %v103
    %v444 = vunpack.c.l.b16 %v104
    %v445 = vunpack.c.h.b16 %v104
    %v446 = vunpack.c.l.b16 %v105
    %v447 = vunpack.c.h.b16 %v105
    %v448 = vunpack.c.l.b16 %v106
    %v449 = vunpack.c.h.b16 %v106
    %v450 = vunpack.c.l.b16 %v107
    %v451 = vunpack.c.h.b16 %v107
    %v452 = vunpack.c.l.b16 %v108
    %v453 = vunpack.c.h.b16 %v108
    %v454 = vunpack.c.l.b16 %v109
    %v455 = vunpack.c.h.b16 %v109
    %v456 = vunpack.c.l.b16 %v110
    %v457 = vunpack.c.h.b16 %v110
    %v458 = vunpack.c.l.b16 %v111
    %v459 = vunpack.c.h.b16 %v111
    %v460 = vunpack.c.l.b16 %v112
    %v461 = vunpack.c.h.b16 %v112
    %v462 = vunpack.c.l.b16 %v113
    %v463 = vunpack.c.h.b16 %v113
    %v464 = vunpack.c.l.b16 %v114
    %v465 = vunpack.c.h.b16 %v114
    %v466 = vunpack.c.l.b16 %v115
    %v467 = vunpack.c.h.b16 %v115
    %v468 = vunpack.c.l.b16 %v116
    %v469 = vunpack.c.h.b16 %v116
    %v470 = vunpack.c.l.b16 %v117
    %v471 = vunpack.c.h.b16 %v117
    %v472 = vunpack.c.l.b16 %v118
    %v473 = vunpack.c.h.b16 %v118
    %v474 = vunpack.c.l.b16 %v119
    %v475 = vunpack.c.h.b16 %v119
    %v476 = vunpack.c.l.b16 %v120
    %v477 = vunpack.c.h.b16 %v120
    %v478 = vunpack.c.l.b16 %v121
    %v479 = vunpack.c.h.b16 %v121
    %v480 = vunpack.c.l.b16 %v122
    %v481 = vunpack.c.h.b16 %v122
    %v482 = vunpack.c.l.b16 %v123
    %v483 = vunpack.c.h.b16 %v123
    %v484 = vunpack.c.l.b16 %v124
    %v485 = vunpack.c.h.b16 %v124
    %v486 = vunpack.c.l.b16 %v125
    %v487 = vunpack.c.h.b16 %v125
    %v488 = vunpack.c.l.b16 %v126
    %v489 = vunpack.c.h.b16 %v126
    %v490 = vunpack.c.l.b16 %v127
    %v491 = vunpack.c.h.b16 %v127
    %v492 = vunpack.c.l.b16 %v128
    %v493 = vunpack.c.h.b16 %v128
    %v494 = vunpack.c.l.b16 %v129
    %v495 = vunpack.c.h.b16 %v129
    %v496 = vunpack.c.l.b16 %v130
    %v497 = vunpack.c.h.b16 %v130
    %v498 = vunpack.c.l.b16 %v131
    %v499 = vunpack.c.h.b16 %v131
    %v500 = vunpack.c.l.b16 %v132
    %v501 = vunpack.c.h.b16 %v132
    %v502 = vunpack.c.l.b16 %v133
    %v503 = vunpack.c.h.b16 %v133
    %v504 = vunpack.c.l.b16 %v134
    %v505 = vunpack.c.h.b16 %v134
    %v506 = vunpack.c.l.b16 %v135
    %v507 = vunpack.c.h.b16 %v135
    %v508 = vunpack.c.l.b16 %v136
    %v509 = vunpack.c.h.b16 %v136
    %v510 = vunpack.c.l.b16 %v137
    %v511 = vunpack.c.h.b16 %v137
    %v512 = vunpack.c.l.b16 %v138
    %v513 = vunpack.c.h.b16 %v138
    %v514 = vunpack.c.l.b16 %v139
    %v515 = vunpack.c.h.b16 %v139
    %v516 = vunpack.c.l.b16 %v140
    %v517 = vunpack.c.h.b16 %v140
    %v518 = vunpack.c.l.b16 %v141
    %v519 = vunpack.c.h.b16 %v141
    %v520 = vunpack.c.l.b16 %v142
    %v521 = vunpack.c.h.b16 %v142
    %v522 = vunpack.c.l.b16 %v143
    %v523 = vunpack.c.h.b16 %v143
    %v524 = vunpack.c.l.b16 %v144
    %v525 = vunpack.c.h.b16 %v144
    %v526 = vunpack.c.l.b16 %v145
    %v527 = vunpack.c.h.b16 %v145
    %v528 = vunpack.c.l.b16 %v146
    %v529 = vunpack.c.h.b16 %v146
    %v530 = vunpack.c.l.b16 %v147
    %v531 = vunpack.c.h.b16 %v147
    %v532 = vunpack.c.l.b16 %v148
    %v533 = vunpack.c.h.b16 %v148
    %v534 = vunpack.c.l.b16 %v149
    %v535 = vunpack.c.h.b16 %v149
    %v536 = vunpack.c.l.b16 %v150
    %v537 = vunpack.c.h.b16 %v150
    %v538 = vunpack.c.l.b16 %v151
    %v539 = vunpack.c.h.b16 %v151
    %v540 = vunpack.c.l.b16 %v152
    %v541 = vunpack.c.h.b16 %v152
    %v542 = vunpack.c.l.b16 %v153
    %v543 = vunpack.c.h.b16 %v153
    %v544 = vunpack.c.l.b16 %v154
    %v545 = vunpack.c.h.b16 %v154
    %v546 = vunpack.c.l.b16 %v155
    %v547 = vunpack.c.h.b16 %v155
    %v548 = vunpack.c.l.b16 %v156
    %v549 = vunpack.c.h.b16 %v156
    %v550 = vunpack.c.l.b16 %v157
    %v551 = vunpack.c.h.b16 %v157
    %v552 = vunpack.c.l.b16 %v158
    %v553 = vunpack.c.h.b16 %v158
    %v554 = vunpack.c.l.b16 %v159
    %v555 = vunpack.c.h.b16 %v159
    %v556 = vunpack.c.l.b16 %v160
    %v557 = vunpack.c.h.b16 %v160
    %v558 = vunpack.c.l.b16 %v161
    %v559 = vunpack.c.h.b16 %v161
    %v560 = vunpack.c.l.b16 %v162
    %v561 = vunpack.c.h.b16 %v162
    %v562 = vunpack.c.l.b16 %v163
    %v563 = vunpack.c.h.b16 %v163
    %v564 = vunpack.c.l.b16 %v164
    %v565 = vunpack.c.h.b16 %v164
    %v566 = vunpack.c.l.b16 %v165
    %v567 = vunpack.c.h.b16 %v165
    %v568 = vunpack.c.l.b16 %v166
    %v569 = vunpack.c.h.b16 %v166
    %v570 = vunpack.c.l.b16 %v167
    %v571 = vunpack.c.h.b16 %v167
    %v572 = vunpack.c.l.b16 %v168
    %v573 = vunpack.c.h.b16 %v168
    %v574 = vunpack.c.l.b16 %v169
    %v575 = vunpack.c.h.b16 %v169
    %v576 = vunpack.c.l.b16 %v170
    %v577 = vunpack.c.h.b16 %v170
    %v578 = vunpack.c.l.b16 %v171
    %v579 = vunpack.c.h.b16 %v171
    %v580 = vunpack.c.l.b16 %v172
    %v581 = vunpack.c.h.b16 %v172
    %v582 = vunpack.c.l.b16 %v173
    %v583 = vunpack.c.h.b16 %v173
    %v584 = vunpack.c.l.b16 %v174
    %v585 = vunpack.c.h.b16 %v174
    %v586 = vunpack.c.l.b16 %v175
    %v587 = vunpack.c.h.b16 %v175
    %v588 = vunpack.c.l.b16 %v176
    %v589 = vunpack.c.h.b16 %v176
    %v590 = vunpack.c.l.b16 %v177
    %v591 = vunpack.c.h.b16 %v177
    %v592 = vunpack.c.l.b16 %v178
    %v593 = vunpack.c.h.b16 %v178
    %v594 = vunpack.c.l.b16 %v179
    %v595 = vunpack.c.h.b16 %v179
    %v596 = vunpack.c.l.b16 %v180
    %v597 = vunpack.c.h.b16 %v180
    %v598 = vunpack.c.l.b16 %v181
    %v599 = vunpack.c.h.b16 %v181
    %v600 = vunpack.c.l.b16 %v182
    %v601 = vunpack.c.h.b16 %v182
    %v602 = vunpack.c.l.b16 %v183
    %v603 = vunpack.c.h.b16 %v183
    %v604 = vunpack.c.l.b16 %v184
    %v605 = vunpack.c.h.b16 %v184
    %v606 = vunpack.c.l.b16 %v185
    %v607 = vunpack.c.h.b16 %v185
    %v608 = vunpack.c.l.b16 %v186
    %v609 = vunpack.c.h.b16 %v186
    %v610 = vunpack.c.l.b16 %v187
    %v611 = vunpack.c.h.b16 %v187
    %v612 = vunpack.c.l.b16 %v188
    %v613 = vunpack.c.h.b16 %v188
    %v614 = vunpack.c.l.b16 %v189
    %v615 = vunpack.c.h.b16 %v189
    %v616 = vpack.c.b16 %v376, %v360
    %v617 = vpack.c.b16 %v377, %v361
    %v618 = vpack.c.b16 %v378, %v362
    %v619 = vpack.c.b16 %v379, %v363
    %v620 = vpack.c.b16 %v380, %v364
    %v621 = vpack.c.b16 %v381, %v365
    %v622 = vpack.c.b16 %v382, %v366
    %v623 = vpack.c.b16 %v383, %v367
    %v624 = vpack.c.b16 %v384, %v368
    %v625 = vpack.c.b16 %v385, %v369
    %v626 = vpack.c.b16 %v386, %v370
    %v627 = vpack.c.b16 %v387, %v371
    %v628 = vpack.c.b16 %v388, %v372
    %v629 = vpack.c.b16 %v389, %v373
    %v630 = vpack.c.b16 %v390, %v374
    %v631 = vpack.c.b16 %v391, %v375
    %v632 = vpack.c.b16 %v408, %v392
    %v633 = vpack.c.b16 %v409, %v393
    %v634 = vpack.c.b16 %v410, %v394
    %v635 = vpack.c.b16 %v411, %v395
    %v636 = vpack.c.b16 %v412, %v396
    %v637 = vpack.c.b16 %v413, %v397
    %v638 = vpack.c.b16 %v414, %v398
    %v639 = vpack.c.b16 %v415, %v399
    %v640 = vpack.c.b16 %v416, %v400
    %v641 = vpack.c.b16 %v417, %v401
    %v642 = vpack.c.b16 %v418, %v402
    %v643 = vpack.c.b16 %v419, %v403
    %v644 = vpack.c.b16 %v420, %v404
    %v645 = vpack.c.b16 %v421, %v405
    %v646 = vpack.c.b16 %v422, %v406
    %v647 = vpack.c.b16 %v423, %v407
    %v648 = vpack.c.b16 %v440, %v424
    %v649 = vpack.c.b16 %v441, %v425
    %v650 = vpack.c.b16 %v442, %v426
    %v651 = vpack.c.b16 %v443, %v427
    %v652 = vpack.c.b16 %v444, %v428
    %v653 = vpack.c.b16 %v445, %v429
    %v654 = vpack.c.b16 %v446, %v430
    %v655 = vpack.c.b16 %v447, %v431
    %v656 = vpack.c.b16 %v448, %v432
    %v657 = vpack.c.b16 %v449, %v433
    %v658 = vpack.c.b16 %v450, %v434
    %v659 = vpack.c.b16 %v451, %v435
    %v660 = vpack.c.b16 %v452, %v436
    %v661 = vpack.c.b16 %v453, %v437
    %v662 = vpack.c.b16 %v454, %v438
    %v663 = vpack.c.b16 %v455, %v439
    %v664 = vpack.c.b16 %v472, %v456
    %v665 = vpack.c.b16 %v473, %v457
    %v666 = vpack.c.b16 %v474, %v458
    %v667 = vpack.c.b16 %v475, %v459
    %v668 = vpack.c.b16 %v476, %v460
    %v669 = vpack.c.b16 %v477, %v461
    %v670 = vpack.c.b16 %v478, %v462
    %v671 = vpack.c.b16 %v479, %v463
    %v672 = vpack.c.b16 %v480, %v464
    %v673 = vpack.c.b16 %v481, %v465
    %v674 = vpack.c.b16 %v482, %v466
    %v675 = vpack.c.b16 %v483, %v467
    %v676 = vpack.c.b16 %v484, %v468
    %v677 = vpack.c.b16 %v485, %v469
    %v678 = vpack.c.b16 %v486, %v470
    %v679 = vpack.c.b16 %v487, %v471
    %v680 = vpack.c.b16 %v504, %v488
    %v681 = vpack.c.b16 %v505, %v489
    %v682 = vpack.c.b16 %v506, %v490
    %v683 = vpack.c.b16 %v507, %v491
    %v684 = vpack.c.b16 %v508, %v492
    %v685 = vpack.c.b16 %v509, %v493
    %v686 = vpack.c.b16 %v510, %v494
    %v687 = vpack.c.b16 %v511, %v495
    %v688 = vpack.c.b16 %v512, %v496
    %v689 = vpack.c.b16 %v513, %v497
    %v690 = vpack.c.b16 %v514, %v498
    %v691 = vpack.c.b16 %v515, %v499
    %v692 = vpack.c.b16 %v516, %v500
    %v693 = vpack.c.b16 %v517, %v501
    %v694 = vpack.c.b16 %v518, %v502
    %v695 = vpack.c.b16 %v519, %v503
    %v696 = vpack.c.b16 %v536, %v520
    %v697 = vpack.c.b16 %v537, %v521
    %v698 = vpack.c.b16 %v538, %v522
    %v699 = vpack.c.b16 %v539, %v523
    %v700 = vpack.c.b16 %v540, %v524
    %v701 = vpack.c.b16 %v541, %v525
    %v702 = vpack.c.b16 %v542, %v526
    %v703 = vpack.c.b16 %v543, %v527
    %v704 = vpack.c.b16 %v544, %v528
    %v705 = vpack.c.b16 %v545, %v529
    %v706 = vpack.c.b16 %v546, %v530
    %v707 = vpack.c.b16 %v547, %v531
    %v708 = vpack.c.b16 %v548, %v532
    %v709 = vpack.c.b16 %v549, %v533
    %v710 = vpack.c.b16 %v550, %v534
    %v711 = vpack.c.b16 %v551, %v535
    %v712 = vpack.c.b16 %v568, %v552
    %v713 = vpack.c.b16 %v569, %v553
    %v714 = vpack.c.b16 %v570, %v554
    %v715 = vpack.c.b16 %v571, %v555
    %v716 = vpack.c.b16 %v572, %v556
    %v717 = vpack.c.b16 %v573, %v557
    %v718 = vpack.c.b16 %v574, %v558
    %v719 = vpack.c.b16 %v575, %v559
    %v720 = vpack.c.b16 %v576, %v560
    %v721 = vpack.c.b16 %v577, %v561
    %v722 = vpack.c.b16 %v578, %v562
    %v723 = vpack.c.b16 %v579, %v563
    %v724 = vpack.c.b16 %v580, %v564
    %v725 = vpack.c.b16 %v581, %v565
    %v726 = vpack.c.b16 %v582, %v566
    %v727 = vpack.c.b16 %v583, %v567
    %v728 = vpack.c.b16 %v600, %v584
    %v729 = vpack.c.b16 %v601, %v585
    %v730 = vpack.c.b16 %v602, %v586
    %v731 = vpack.c.b16 %v603, %v587
    %v732 = vpack.c.b16 %v604, %v588
    %v733 = vpack.c.b16 %v605, %v589
    %v734 = vpack.c.b16 %v606, %v590
    %v735 = vpack.c.b16 %v607, %v591
    %v736 = vpack.c.b16 %v608, %v592
    %v737 = vpack.c.b16 %v609, %v593
    %v738 = vpack.c.b16 %v610, %v594
    %v739 = vpack.c.b16 %v611, %v595
    %v740 = vpack.c.b16 %v612, %v596
    %v741 = vpack.c.b16 %v613, %v597
    %v742 = vpack.c.b16 %v614, %v598
    %v743 = vpack.c.b16 %v615, %v599
    %872 = vmatpush.bf16.msra.mxu0 %v728
    %873 = vmatpush.bf16.msra.mxu0 %v712
    %874 = vmatpush.bf16.msra.mxu0 %v696
    %875 = vmatpush.bf16.msra.mxu0 %v680
    %876 = vmatpush.bf16.msra.mxu0 %v664
    %877 = vmatpush.bf16.msra.mxu0 %v648
    %878 = vmatpush.bf16.msra.mxu0 %v632
    %879 = vmatpush.bf16.msra.mxu0 %v616
    %880 = vmatmul.bf16.gmra.mxu0 %v230
    %v881 = vpop.f32.mrf.mxu0
    %v882 = vadd.f32 %v194, %v881
    %v883 = vpop.f32.mrf.mxu0
    %v884 = vadd.f32 %v194, %v883
    %885 = vdwg.mxu0
    %886 = vmatpush.bf16.msra.mxu0 %v729
    %887 = vmatpush.bf16.msra.mxu0 %v713
    %888 = vmatpush.bf16.msra.mxu0 %v697
    %889 = vmatpush.bf16.msra.mxu0 %v681
    %890 = vmatpush.bf16.msra.mxu0 %v665
    %891 = vmatpush.bf16.msra.mxu0 %v649
    %892 = vmatpush.bf16.msra.mxu0 %v633
    %893 = vmatpush.bf16.msra.mxu0 %v617
    %894 = vmatmul.bf16.gmra.mxu0 %v230
    %v895 = vpop.f32.mrf.mxu0
    %v896 = vadd.f32 %v195, %v895
    %v897 = vpop.f32.mrf.mxu0
    %v898 = vadd.f32 %v195, %v897
    %899 = vdwg.mxu0
    %900 = vmatpush.bf16.msra.mxu0 %v730
    %901 = vmatpush.bf16.msra.mxu0 %v714
    %902 = vmatpush.bf16.msra.mxu0 %v698
    %903 = vmatpush.bf16.msra.mxu0 %v682
    %904 = vmatpush.bf16.msra.mxu0 %v666
    %905 = vmatpush.bf16.msra.mxu0 %v650
    %906 = vmatpush.bf16.msra.mxu0 %v634
    %907 = vmatpush.bf16.msra.mxu0 %v618
    %908 = vmatmul.bf16.gmra.mxu0 %v230
    %v909 = vpop.f32.mrf.mxu0
    %v910 = vadd.f32 %v196, %v909
    %v911 = vpop.f32.mrf.mxu0
    %v912 = vadd.f32 %v196, %v911
    %913 = vdwg.mxu0
    %914 = vmatpush.bf16.msra.mxu0 %v731
    %915 = vmatpush.bf16.msra.mxu0 %v715
    %916 = vmatpush.bf16.msra.mxu0 %v699
    %917 = vmatpush.bf16.msra.mxu0 %v683
    %918 = vmatpush.bf16.msra.mxu0 %v667
    %919 = vmatpush.bf16.msra.mxu0 %v651
    %920 = vmatpush.bf16.msra.mxu0 %v635
    %921 = vmatpush.bf16.msra.mxu0 %v619
    %922 = vmatmul.bf16.gmra.mxu0 %v230
    %v923 = vpop.f32.mrf.mxu0
    %v924 = vadd.f32 %v197, %v923
    %v925 = vpop.f32.mrf.mxu0
    %v926 = vadd.f32 %v197, %v925
    %927 = vdwg.mxu0
    %928 = vmatpush.bf16.msra.mxu0 %v732
    %929 = vmatpush.bf16.msra.mxu0 %v716
    %930 = vmatpush.bf16.msra.mxu0 %v700
    %931 = vmatpush.bf16.msra.mxu0 %v684
    %932 = vmatpush.bf16.msra.mxu0 %v668
    %933 = vmatpush.bf16.msra.mxu0 %v652
    %934 = vmatpush.bf16.msra.mxu0 %v636
    %935 = vmatpush.bf16.msra.mxu0 %v620
    %936 = vmatmul.bf16.gmra.mxu0 %v230
    %v937 = vpop.f32.mrf.mxu0
    %v938 = vadd.f32 %v198, %v937
    %v939 = vpop.f32.mrf.mxu0
    %v940 = vadd.f32 %v198, %v939
    %941 = vdwg.mxu0
    %942 = vmatpush.bf16.msra.mxu0 %v733
    %943 = vmatpush.bf16.msra.mxu0 %v717
    %944 = vmatpush.bf16.msra.mxu0 %v701
    %945 = vmatpush.bf16.msra.mxu0 %v685
    %946 = vmatpush.bf16.msra.mxu0 %v669
    %947 = vmatpush.bf16.msra.mxu0 %v653
    %948 = vmatpush.bf16.msra.mxu0 %v637
    %949 = vmatpush.bf16.msra.mxu0 %v621
    %950 = vmatmul.bf16.gmra.mxu0 %v230
    %v951 = vpop.f32.mrf.mxu0
    %v952 = vadd.f32 %v199, %v951
    %v953 = vpop.f32.mrf.mxu0
    %v954 = vadd.f32 %v199, %v953
    %955 = vdwg.mxu0
    %956 = vmatpush.bf16.msra.mxu0 %v734
    %957 = vmatpush.bf16.msra.mxu0 %v718
    %958 = vmatpush.bf16.msra.mxu0 %v702
    %959 = vmatpush.bf16.msra.mxu0 %v686
    %960 = vmatpush.bf16.msra.mxu0 %v670
    %961 = vmatpush.bf16.msra.mxu0 %v654
    %962 = vmatpush.bf16.msra.mxu0 %v638
    %963 = vmatpush.bf16.msra.mxu0 %v622
    %964 = vmatmul.bf16.gmra.mxu0 %v230
    %v965 = vpop.f32.mrf.mxu0
    %v966 = vadd.f32 %v200, %v965
    %v967 = vpop.f32.mrf.mxu0
    %v968 = vadd.f32 %v200, %v967
    %969 = vdwg.mxu0
    %970 = vmatpush.bf16.msra.mxu0 %v735
    %971 = vmatpush.bf16.msra.mxu0 %v719
    %972 = vmatpush.bf16.msra.mxu0 %v703
    %973 = vmatpush.bf16.msra.mxu0 %v687
    %974 = vmatpush.bf16.msra.mxu0 %v671
    %975 = vmatpush.bf16.msra.mxu0 %v655
    %976 = vmatpush.bf16.msra.mxu0 %v639
    %977 = vmatpush.bf16.msra.mxu0 %v623
    %978 = vmatmul.bf16.gmra.mxu0 %v230
    %v979 = vpop.f32.mrf.mxu0
    %v980 = vadd.f32 %v201, %v979
    %v981 = vpop.f32.mrf.mxu0
    %v982 = vadd.f32 %v201, %v981
    %983 = vdwg.mxu0
    %984 = vmatpush.bf16.msra.mxu0 %v736
    %985 = vmatpush.bf16.msra.mxu0 %v720
    %986 = vmatpush.bf16.msra.mxu0 %v704
    %987 = vmatpush.bf16.msra.mxu0 %v688
    %988 = vmatpush.bf16.msra.mxu0 %v672
    %989 = vmatpush.bf16.msra.mxu0 %v656
    %990 = vmatpush.bf16.msra.mxu0 %v640
    %991 = vmatpush.bf16.msra.mxu0 %v624
    %992 = vmatmul.bf16.gmra.mxu0 %v230
    %v993 = vpop.f32.mrf.mxu0
    %v994 = vadd.f32 %v202, %v993
    %v995 = vpop.f32.mrf.mxu0
    %v996 = vadd.f32 %v202, %v995
    %997 = vdwg.mxu0
    %998 = vmatpush.bf16.msra.mxu0 %v737
    %999 = vmatpush.bf16.msra.mxu0 %v721
    %1000 = vmatpush.bf16.msra.mxu0 %v705
    %1001 = vmatpush.bf16.msra.mxu0 %v689
    %1002 = vmatpush.bf16.msra.mxu0 %v673
    %1003 = vmatpush.bf16.msra.mxu0 %v657
    %1004 = vmatpush.bf16.msra.mxu0 %v641
    %1005 = vmatpush.bf16.msra.mxu0 %v625
    %1006 = vmatmul.bf16.gmra.mxu0 %v230
    %v1007 = vpop.f32.mrf.mxu0
    %v1008 = vadd.f32 %v203, %v1007
    %v1009 = vpop.f32.mrf.mxu0
    %v1010 = vadd.f32 %v203, %v1009
    %1011 = vdwg.mxu0
    %1012 = vmatpush.bf16.msra.mxu0 %v738
    %1013 = vmatpush.bf16.msra.mxu0 %v722
    %1014 = vmatpush.bf16.msra.mxu0 %v706
    %1015 = vmatpush.bf16.msra.mxu0 %v690
    %1016 = vmatpush.bf16.msra.mxu0 %v674
    %1017 = vmatpush.bf16.msra.mxu0 %v658
    %1018 = vmatpush.bf16.msra.mxu0 %v642
    %1019 = vmatpush.bf16.msra.mxu0 %v626
    %1020 = vmatmul.bf16.gmra.mxu0 %v230
    %v1021 = vpop.f32.mrf.mxu0
    %v1022 = vadd.f32 %v204, %v1021
    %v1023 = vpop.f32.mrf.mxu0
    %v1024 = vadd.f32 %v204, %v1023
    %1025 = vdwg.mxu0
    %1026 = vmatpush.bf16.msra.mxu0 %v739
    %1027 = vmatpush.bf16.msra.mxu0 %v723
    %1028 = vmatpush.bf16.msra.mxu0 %v707
    %1029 = vmatpush.bf16.msra.mxu0 %v691
    %1030 = vmatpush.bf16.msra.mxu0 %v675
    %1031 = vmatpush.bf16.msra.mxu0 %v659
    %1032 = vmatpush.bf16.msra.mxu0 %v643
    %1033 = vmatpush.bf16.msra.mxu0 %v627
    %1034 = vmatmul.bf16.gmra.mxu0 %v230
    %v1035 = vpop.f32.mrf.mxu0
    %v1036 = vadd.f32 %v205, %v1035
    %v1037 = vpop.f32.mrf.mxu0
    %v1038 = vadd.f32 %v205, %v1037
    %1039 = vdwg.mxu0
    %1040 = vmatpush.bf16.msra.mxu0 %v740
    %1041 = vmatpush.bf16.msra.mxu0 %v724
    %1042 = vmatpush.bf16.msra.mxu0 %v708
    %1043 = vmatpush.bf16.msra.mxu0 %v692
    %1044 = vmatpush.bf16.msra.mxu0 %v676
    %1045 = vmatpush.bf16.msra.mxu0 %v660
    %1046 = vmatpush.bf16.msra.mxu0 %v644
    %1047 = vmatpush.bf16.msra.mxu0 %v628
    %1048 = vmatmul.bf16.gmra.mxu0 %v230
    %v1049 = vpop.f32.mrf.mxu0
    %v1050 = vadd.f32 %v206, %v1049
    %v1051 = vpop.f32.mrf.mxu0
    %v1052 = vadd.f32 %v206, %v1051
    %1053 = vdwg.mxu0
    %1054 = vmatpush.bf16.msra.mxu0 %v741
    %1055 = vmatpush.bf16.msra.mxu0 %v725
    %1056 = vmatpush.bf16.msra.mxu0 %v709
    %1057 = vmatpush.bf16.msra.mxu0 %v693
    %1058 = vmatpush.bf16.msra.mxu0 %v677
    %1059 = vmatpush.bf16.msra.mxu0 %v661
    %1060 = vmatpush.bf16.msra.mxu0 %v645
    %1061 = vmatpush.bf16.msra.mxu0 %v629
    %1062 = vmatmul.bf16.gmra.mxu0 %v230
    %v1063 = vpop.f32.mrf.mxu0
    %v1064 = vadd.f32 %v207, %v1063
    %v1065 = vpop.f32.mrf.mxu0
    %v1066 = vadd.f32 %v207, %v1065
    %1067 = vdwg.mxu0
    %1068 = vmatpush.bf16.msra.mxu0 %v742
    %1069 = vmatpush.bf16.msra.mxu0 %v726
    %1070 = vmatpush.bf16.msra.mxu0 %v710
    %1071 = vmatpush.bf16.msra.mxu0 %v694
    %1072 = vmatpush.bf16.msra.mxu0 %v678
    %1073 = vmatpush.bf16.msra.mxu0 %v662
    %1074 = vmatpush.bf16.msra.mxu0 %v646
    %1075 = vmatpush.bf16.msra.mxu0 %v630
    %1076 = vmatmul.bf16.gmra.mxu0 %v230
    %v1077 = vpop.f32.mrf.mxu0
    %v1078 = vadd.f32 %v208, %v1077
    %v1079 = vpop.f32.mrf.mxu0
    %v1080 = vadd.f32 %v208, %v1079
    %1081 = vdwg.mxu0
    %1082 = vmatpush.bf16.msra.mxu0 %v743
    %1083 = vmatpush.bf16.msra.mxu0 %v727
    %1084 = vmatpush.bf16.msra.mxu0 %v711
    %1085 = vmatpush.bf16.msra.mxu0 %v695
    %1086 = vmatpush.bf16.msra.mxu0 %v679
    %1087 = vmatpush.bf16.msra.mxu0 %v663
    %1088 = vmatpush.bf16.msra.mxu0 %v647
    %1089 = vmatpush.bf16.msra.mxu0 %v631
    %1090 = vmatmul.bf16.gmra.mxu0 %v230
    %v1091 = vpop.f32.mrf.mxu0
    %v1092 = vadd.f32 %v209, %v1091
    %v1093 = vpop.f32.mrf.mxu0
    %v1094 = vadd.f32 %v209, %v1093
    %1095 = vdwg.mxu0
    %v1096 = vmax.f32 %v882, 0.0
    %v1097 = vmax.f32 %v896, 0.0
    %v1098 = vmax.f32 %v910, 0.0
    %v1099 = vmax.f32 %v924, 0.0
    %v1100 = vmax.f32 %v938, 0.0
    %v1101 = vmax.f32 %v952, 0.0
    %v1102 = vmax.f32 %v966, 0.0
    %v1103 = vmax.f32 %v980, 0.0
    %v1104 = vmax.f32 %v994, 0.0
    %v1105 = vmax.f32 %v1008, 0.0
    %v1106 = vmax.f32 %v1022, 0.0
    %v1107 = vmax.f32 %v1036, 0.0
    %v1108 = vmax.f32 %v1050, 0.0
    %v1109 = vmax.f32 %v1064, 0.0
    %v1110 = vmax.f32 %v1078, 0.0
    %v1111 = vmax.f32 %v1092, 0.0
    %v1112 = vmax.f32 %v884, 0.0
    %v1113 = vmax.f32 %v898, 0.0
    %v1114 = vmax.f32 %v912, 0.0
    %v1115 = vmax.f32 %v926, 0.0
    %v1116 = vmax.f32 %v940, 0.0
    %v1117 = vmax.f32 %v954, 0.0
    %v1118 = vmax.f32 %v968, 0.0
    %v1119 = vmax.f32 %v982, 0.0
    %v1120 = vmax.f32 %v996, 0.0
    %v1121 = vmax.f32 %v1010, 0.0
    %v1122 = vmax.f32 %v1024, 0.0
    %v1123 = vmax.f32 %v1038, 0.0
    %v1124 = vmax.f32 %v1052, 0.0
    %v1125 = vmax.f32 %v1066, 0.0
    %v1126 = vmax.f32 %v1080, 0.0
    %v1127 = vmax.f32 %v1094, 0.0
    %v1128 = vpack.c.bf16 %v1097, %v1096
    %v1129 = vpack.c.bf16 %v1099, %v1098
    %v1130 = vpack.c.bf16 %v1101, %v1100
    %v1131 = vpack.c.bf16 %v1103, %v1102
    %v1132 = vpack.c.bf16 %v1105, %v1104
    %v1133 = vpack.c.bf16 %v1107, %v1106
    %v1134 = vpack.c.bf16 %v1109, %v1108
    %v1135 = vpack.c.bf16 %v1111, %v1110
    %v1136 = vpack.c.bf16 %v1113, %v1112
    %v1137 = vpack.c.bf16 %v1115, %v1114
    %v1138 = vpack.c.bf16 %v1117, %v1116
    %v1139 = vpack.c.bf16 %v1119, %v1118
    %v1140 = vpack.c.bf16 %v1121, %v1120
    %v1141 = vpack.c.bf16 %v1123, %v1122
    %v1142 = vpack.c.bf16 %v1125, %v1124
    %v1143 = vpack.c.bf16 %v1127, %v1126
    %1144 = vst [vmem:[#allocation8] sm:$0xff] %v1128
    %1145 = vst [vmem:[#allocation8 + $0x8] sm:$0xff] %v1129
    %1146 = vst [vmem:[#allocation8 + $0x10] sm:$0xff] %v1130
    %1147 = vst [vmem:[#allocation8 + $0x18] sm:$0xff] %v1131
    %1148 = vst [vmem:[#allocation8 + $0x20] sm:$0xff] %v1132
    %1149 = vst [vmem:[#allocation8 + $0x28] sm:$0xff] %v1133
    %1150 = vst [vmem:[#allocation8 + $0x30] sm:$0xff] %v1134
    %1151 = vst [vmem:[#allocation8 + $0x38] sm:$0xff] %v1135
    %1152 = vst [vmem:[#allocation8 + $0x40] sm:$0xff] %v1136
    %1153 = vst [vmem:[#allocation8 + $0x48] sm:$0xff] %v1137
    %1154 = vst [vmem:[#allocation8 + $0x50] sm:$0xff] %v1138
    %1155 = vst [vmem:[#allocation8 + $0x58] sm:$0xff] %v1139
    %1156 = vst [vmem:[#allocation8 + $0x60] sm:$0xff] %v1140
    %1157 = vst [vmem:[#allocation8 + $0x68] sm:$0xff] %v1141
    %1158 = vst [vmem:[#allocation8 + $0x70] sm:$0xff] %v1142
    %1159 = vst [vmem:[#allocation8 + $0x78] sm:$0xff] %v1143
    // Predicated region
    $region26: #{tpu_custom_call.1} parent=1 // pred_check
      _
    $region27: #{tpu_custom_call.1} parent=1 // pred_check_branch
      %1161 = sbr.rel (0) target = $region29
    $region28: #{tpu_custom_call.1} parent=1 // pred_region
      %1163 = vsyncadd [#allocation4], 0
      %s1164 = sshll.u32 [#allocation8], 4
      %s1165 = int_to_ptr.vmem [resolvable:$true] %s1164
      %s1166 = sshll.u32 %s3, 4
      %s1167 = int_to_ptr.hbm [resolvable:$true] %s1166
      %1172 = dma.vmem_to_hbm [thread:$0]  %s1165, 2048, %s1167, [#allocation4], 1024, 1024, 64
    $region29: #{tpu_custom_call.1} parent=1 // pred_fallthru
      _
    // Predicated region
    $region30: #{tpu_custom_call.1} parent=1 // pred_check
      _
    $region31: #{tpu_custom_call.1} parent=1 // pred_check_branch
      %1174 = sbr.rel (0) target = $region33
    $region32: #{tpu_custom_call.1} parent=1 // pred_region
      %1176 = dma.done [#allocation4], 2048
    $region33: #{tpu_custom_call.1} parent=1 // pred_fallthru
      _
    %1177 = vsyncpa [#allocation3], 1
    %1178 = vsyncpa [#allocation6], 1
    %1179 = vsyncpa [#allocation4], 1

</llo_original>
